<compile_context>
chip_gen: v5e
topology: v5e:2x2
jax: 0.10.0
libtpu: 0.0.40
codegen_flags: <defaults>
</compile_context>

<pallas_src>
import functools

import jax
import jax.numpy as jnp
from jax import lax
from jax.experimental import pallas as pl
from jax.experimental.pallas import tpu as pltpu

MARGIN = 5.0
PAIRWISE_EPS = 1e-6  # torch F.pairwise_distance default eps (added to the diff)


def _round_up(x, m):
    return ((x + m - 1) // m) * m


def _contrastive_loss_kernel(x1_ref, x2_ref, lbl_ref, out_ref, acc_ref, *,
                             batch, tile_rows, margin, inv_batch):
    i = pl.program_id(0)

    @pl.when(i == 0)
    def _init():
        acc_ref[...] = jnp.zeros_like(acc_ref)

    # f32 compute regardless of input dtype (v5e has no bf16 VPU/EUP path,
    # and f32 accumulation is the right call everywhere).
    x1 = x1_ref[...].astype(jnp.float32)          # (TB, D)
    x2 = x2_ref[...].astype(jnp.float32)          # (TB, D)
    lbl = lbl_ref[...].astype(jnp.float32)        # (TB, 1)

    diff = x1 - x2 + PAIRWISE_EPS                 # (TB, D)
    sumsq = jnp.sum(diff * diff, axis=-1, keepdims=True)   # (TB, 1) == d^2
    dist = jnp.sqrt(sumsq)                        # (TB, 1), EUP

    pos = lbl * sumsq                             # label * d^2 (no sqrt round-trip)
    neg = (1.0 - lbl) * jnp.square(jnp.maximum(margin - dist, 0.0))

    # Mask rows past the true batch size (last tile may be padded to TB rows).
    row = i * tile_rows + lax.broadcasted_iota(jnp.int32, (tile_rows, 1), 0)
    loss_rows = jnp.where(row < batch, pos + neg, 0.0)

    acc_ref[...] += jnp.sum(loss_rows, axis=0, keepdims=True)   # (1, 1) partial sum

    @pl.when(i == pl.num_programs(0) - 1)
    def _finalize():
        out_ref[...] = acc_ref[...] * inv_batch   # single store of the scalar


def contrastive_loss(output_1, output_2, label_lb, *, margin=MARGIN,
                     block_rows=None):
    """output_1, output_2: (B, D); label_lb: (B, 1) -> scalar f32 loss."""
    B, D = output_1.shape
    assert output_2.shape == (B, D)
    assert label_lb.shape == (B, 1)

    if block_rows is None:
        # Aim for ~2 MiB per f32 input tile; rows a multiple of 8.
        bytes_per_row = D * 4
        target_rows = max(8, (2 * 1024 * 1024) // bytes_per_row)
        block_rows = min(_round_up(B, 8), _round_up(target_rows, 8))
    tile_rows = _round_up(block_rows, 8)
    n_tiles = pl.cdiv(B, tile_rows)

    kernel = functools.partial(
        _contrastive_loss_kernel,
        batch=B,
        tile_rows=tile_rows,
        margin=float(margin),
        inv_batch=1.0 / B,
    )

    cost = pl.CostEstimate(
        flops=3 * B * D + 6 * B,
        transcendentals=B,                         # one sqrt per row
        bytes_accessed=2 * B * D * output_1.dtype.itemsize + B * 4 + 4,
    )

    out = pl.pallas_call(
        kernel,
        out_shape=jax.ShapeDtypeStruct((1, 1), jnp.float32),
        grid_spec=pltpu.PrefetchScalarGridSpec(
            num_scalar_prefetch=0,
            grid=(n_tiles,),
            in_specs=[
                pl.BlockSpec((tile_rows, D), lambda i: (i, 0)),
                pl.BlockSpec((tile_rows, D), lambda i: (i, 0)),
                pl.BlockSpec((tile_rows, 1), lambda i: (i, 0)),
            ],
            out_specs=pl.BlockSpec((1, 1), lambda i: (0, 0)),
            scratch_shapes=[pltpu.VMEM((1, 1), jnp.float32)],
        ),
        compiler_params=pltpu.CompilerParams(
            dimension_semantics=("arbitrary",),     # reduction over batch tiles
            vmem_limit_bytes=32 * 1024 * 1024,      # headroom; also safe on v7x
        ),
        cost_estimate=cost,
    )(output_1, output_2, label_lb)
    return out[0, 0]


def _reference(output_1, output_2, label_lb, margin=MARGIN):
    diff = output_1 - output_2 + PAIRWISE_EPS
    dist = jnp.sqrt(jnp.sum(diff * diff, axis=-1, keepdims=True))
    loss = (label_lb * dist ** 2
            + (1.0 - label_lb) * jnp.clip(margin - dist, 0.0) ** 2)
    return jnp.mean(loss)


if __name__ == "__main__":
    key = jax.random.PRNGKey(0)
    k1, k2, k3, k4, k5, k6 = jax.random.split(key, 6)

    # Primary small case (matches the module's toy usage): B=8, D=32.
    B, D = 8, 32
    o1 = jax.random.normal(k1, (B, D), dtype=jnp.float32)
    o2 = jax.random.normal(k2, (B, D), dtype=jnp.float32)
    lbl = jax.random.bernoulli(k3, 0.5, (B, 1)).astype(jnp.float32)

    loss = jax.block_until_ready(contrastive_loss(o1, o2, lbl))
    ref = jax.block_until_ready(_reference(o1, o2, lbl))
    assert jnp.allclose(loss, ref, rtol=1e-5, atol=1e-5), (loss, ref)

    # Secondary check: multi-tile grid + ragged last tile (B not a multiple of
    # the block), exercising the accumulator init/finalize and row masking.
    B2, D2 = 20, 32
    p1 = jax.random.normal(k4, (B2, D2), dtype=jnp.float32)
    p2 = jax.random.normal(k5, (B2, D2), dtype=jnp.float32)
    plbl = jax.random.bernoulli(k6, 0.5, (B2, 1)).astype(jnp.float32)

    loss2 = jax.block_until_ready(contrastive_loss(p1, p2, plbl, block_rows=8))
    ref2 = jax.block_until_ready(_reference(p1, p2, plbl))
    assert jnp.allclose(loss2, ref2, rtol=1e-5, atol=1e-5), (loss2, ref2)

    print("KERNEL_OK")
</pallas_src>

<mosaic_0001>
module attributes {stable_mosaic.version = 11 : i64} {
  func.func @_contrastive_loss_kernel(%arg0: i32, %arg1: memref<8x32xf32, #tpu.memory_space<vmem>>, %arg2: memref<8x32xf32, #tpu.memory_space<vmem>>, %arg3: memref<8x1xf32, #tpu.memory_space<vmem>>, %arg4: memref<1x1xf32, #tpu.memory_space<vmem>>, %arg5: memref<1x1xf32, #tpu.memory_space<vmem>>) attributes {dimension_semantics = [#tpu.dimension_semantics<arbitrary>], iteration_bounds = array<i64: 1>, scalar_prefetch = 0 : i64, scratch_operands = 1 : i64, tpu.core_type = #tpu.core_type<tc>, window_params = [{transform_indices = @transform_0, window_bounds = array<i64: 8, 32>}, {transform_indices = @transform_1, window_bounds = array<i64: 8, 32>}, {transform_indices = @transform_2, window_bounds = array<i64: 8, 1>}, {pipeline_mode = #tpu.pipeline_mode<synchronous>, transform_indices = @transform_3, window_bounds = array<i64: 1, 1>}]} {
    %c0_i32 = arith.constant 0 : i32
    %0 = arith.cmpi eq, %arg0, %c0_i32 : i32
    %1 = arith.extui %0 : i1 to i32
    %c0_i32_0 = arith.constant 0 : i32
    %2 = arith.cmpi ne, %1, %c0_i32_0 : i32
    scf.if %2 {
      %cst_19 = arith.constant 0.000000e+00 : f32
      %39 = vector.broadcast %cst_19 : f32 to vector<1x1xf32>
      %c0_20 = arith.constant 0 : index
      %c0_21 = arith.constant 0 : index
      %40 = vector.load %arg5[%c0_20, %c0_21] : memref<1x1xf32, #tpu.memory_space<vmem>>, vector<1x1xf32>
      tpu.vector_store %arg5[%c0_20, %c0_21], %39 {strides = array<i32>} : memref<1x1xf32, #tpu.memory_space<vmem>>, vector<1x1xf32>,
    } else {
    }
    %c0 = arith.constant 0 : index
    %c0_1 = arith.constant 0 : index
    %3 = vector.load %arg1[%c0, %c0_1] : memref<8x32xf32, #tpu.memory_space<vmem>>, vector<8x32xf32>
    %c0_2 = arith.constant 0 : index
    %c0_3 = arith.constant 0 : index
    %4 = vector.load %arg2[%c0_2, %c0_3] : memref<8x32xf32, #tpu.memory_space<vmem>>, vector<8x32xf32>
    %c0_4 = arith.constant 0 : index
    %c0_5 = arith.constant 0 : index
    %5 = vector.load %arg3[%c0_4, %c0_5] : memref<8x1xf32, #tpu.memory_space<vmem>>, vector<8x1xf32>
    %6 = arith.subf %3, %4 : vector<8x32xf32>
    %cst = arith.constant 9.99999997E-7 : f32
    %7 = vector.broadcast %cst : f32 to vector<8x32xf32>
    %8 = arith.addf %6, %7 : vector<8x32xf32>
    %9 = arith.mulf %8, %8 : vector<8x32xf32>
    %cst_6 = arith.constant dense<0.000000e+00> : vector<8xf32>
    %10 = vector.multi_reduction <add>, %9, %cst_6 [1] : vector<8x32xf32> to vector<8xf32>
    %11 = vector.shape_cast %10 : vector<8xf32> to vector<8x1xf32>
    %12 = math.sqrt %11 : vector<8x1xf32>
    %13 = arith.mulf %5, %11 : vector<8x1xf32>
    %cst_7 = arith.constant 1.000000e+00 : f32
    %14 = vector.broadcast %cst_7 : f32 to vector<8x1xf32>
    %15 = arith.subf %14, %5 : vector<8x1xf32>
    %cst_8 = arith.constant 5.000000e+00 : f32
    %16 = vector.broadcast %cst_8 : f32 to vector<8x1xf32>
    %17 = arith.subf %16, %12 : vector<8x1xf32>
    %cst_9 = arith.constant 0.000000e+00 : f32
    %18 = vector.broadcast %cst_9 : f32 to vector<8x1xf32>
    %19 = arith.maximumf %17, %18 : vector<8x1xf32>
    %20 = arith.mulf %19, %19 : vector<8x1xf32>
    %21 = arith.mulf %15, %20 : vector<8x1xf32>
    %c8_i32 = arith.constant 8 : i32
    %22 = arith.muli %arg0, %c8_i32 : i32
    %23 = tpu.iota {dimensions = array<i32: 0>} : vector<8x1xi32>
    %24 = vector.broadcast %22 : i32 to vector<8x1xi32>
    %25 = arith.addi %24, %23 : vector<8x1xi32>
    %c8_i32_10 = arith.constant 8 : i32
    %26 = vector.broadcast %c8_i32_10 : i32 to vector<8x1xi32>
    %27 = arith.cmpi slt, %25, %26 : vector<8x1xi32>
    %28 = arith.addf %13, %21 : vector<8x1xf32>
    %cst_11 = arith.constant 0.000000e+00 : f32
    %29 = vector.broadcast %cst_11 : f32 to vector<8x1xf32>
    %30 = arith.select %27, %28, %29 : vector<8x1xi1>, vector<8x1xf32>
    %c0_12 = arith.constant 0 : index
    %c0_13 = arith.constant 0 : index
    %31 = vector.load %arg5[%c0_12, %c0_13] : memref<1x1xf32, #tpu.memory_space<vmem>>, vector<1x1xf32>
    %cst_14 = arith.constant dense<0.000000e+00> : vector<1xf32>
    %32 = vector.multi_reduction <add>, %30, %cst_14 [0] : vector<8x1xf32> to vector<1xf32>
    %33 = vector.shape_cast %32 : vector<1xf32> to vector<1x1xf32>
    %34 = arith.addf %31, %33 : vector<1x1xf32>
    %c0_15 = arith.constant 0 : index
    %c0_16 = arith.constant 0 : index
    %35 = vector.load %arg5[%c0_15, %c0_16] : memref<1x1xf32, #tpu.memory_space<vmem>>, vector<1x1xf32>
    tpu.vector_store %arg5[%c0_15, %c0_16], %34 {strides = array<i32>} : memref<1x1xf32, #tpu.memory_space<vmem>>, vector<1x1xf32>,
    %c0_i32_17 = arith.constant 0 : i32
    %36 = arith.cmpi eq, %arg0, %c0_i32_17 : i32
    %37 = arith.extui %36 : i1 to i32
    %c0_i32_18 = arith.constant 0 : i32
    %38 = arith.cmpi ne, %37, %c0_i32_18 : i32
    scf.if %38 {
      %c0_19 = arith.constant 0 : index
      %c0_20 = arith.constant 0 : index
      %39 = vector.load %arg5[%c0_19, %c0_20] : memref<1x1xf32, #tpu.memory_space<vmem>>, vector<1x1xf32>
      %cst_21 = arith.constant 1.250000e-01 : f32
      %40 = vector.broadcast %cst_21 : f32 to vector<1x1xf32>
      %41 = arith.mulf %39, %40 : vector<1x1xf32>
      %c0_22 = arith.constant 0 : index
      %c0_23 = arith.constant 0 : index
      %42 = vector.load %arg4[%c0_22, %c0_23] : memref<1x1xf32, #tpu.memory_space<vmem>>, vector<1x1xf32>
      tpu.vector_store %arg4[%c0_22, %c0_23], %41 {strides = array<i32>} : memref<1x1xf32, #tpu.memory_space<vmem>>, vector<1x1xf32>,
    } else {
    }
    return
  }
  func.func @transform_0(%arg0: i32) -> (i32, i32) {
    %c0_i32 = arith.constant 0 : i32
    %c0_i32_0 = arith.constant 0 : i32
    return %arg0, %c0_i32 : i32, i32
  }
  func.func @transform_1(%arg0: i32) -> (i32, i32) {
    %c0_i32 = arith.constant 0 : i32
    %c0_i32_0 = arith.constant 0 : i32
    return %arg0, %c0_i32 : i32, i32
  }
  func.func @transform_2(%arg0: i32) -> (i32, i32) {
    %c0_i32 = arith.constant 0 : i32
    %c0_i32_0 = arith.constant 0 : i32
    return %arg0, %c0_i32 : i32, i32
  }
  func.func @transform_3(%arg0: i32) -> (i32, i32) {
    %c0_i32 = arith.constant 0 : i32
    %c0_i32_0 = arith.constant 0 : i32
    %c0_i32_1 = arith.constant 0 : i32
    return %c0_i32, %c0_i32_0 : i32, i32
  }
}

</mosaic_0001>

<llo_original>
// kernel: tpu_custom_call.1
$region0: #{tpu_custom_call.1}
  #allocation0 [shape = 'u32[]', space=smem, size = 0x4, offset = 0x4, fixed_abs, tag = 'smem constant byte address 0x4 - core index']
  #allocation1 [shape = 'u32[72,128]{1,0:T(1,128)}', space=vmem, size = 0x9000, scoped, tag = 'internal scratch']
  #allocation2 [shape = 'f32[1,1]{1,0:T(1,128)}', space=vmem, size = 0x200, scoped, tag = 'scratch operand']
  %s0 = inlined_call_operand.vmem [shape: f32[8,32], index: 0, kind: input, shape index: {}]
  %s1 = inlined_call_operand.hbm [shape: f32[8,32], index: 1, kind: input, shape index: {}]
  %s2 = inlined_call_operand.vmem [shape: f32[8,1], index: 2, kind: input, shape index: {}]
  %s3 = inlined_call_operand.hbm [shape: f32[1,1], index: 3, kind: output, shape index: {}]
  %s4 = sld [smem:[#allocation0]]
  $region34: #{tpu_custom_call.1} parent=0
    _
  %s6 = ssub.s32 1, %s4
  %s7 = scalar_select 0, %s6, %s4
  $region1: #{tpu_custom_call.1} parent=0
    #allocation3 [shape = 'u8[4096]{0}', space=vmem, size = 0x1000, scoped, tag = 'input window, operand 1, single buffered']
    #allocation4 [shape = 's32[1]{0}', space=sflag, size = 0x4, scoped, tag = 'scoped memory for tpu_custom_call.1']
    #allocation5 [shape = 's32[1]{0}', space=sflag, size = 0x4, scoped, tag = 'scoped memory for tpu_custom_call.1']
    #allocation6 [shape = 'u8[512]{0}', space=vmem, size = 0x400, scoped, tag = 'output window, operand 0, single buffered']
    %8 = vsyncpa [#allocation4], 0
    %9 = vsyncpa [#allocation5], 0
    // Predicated region
    $region2: #{tpu_custom_call.1} parent=1 // pred_check
      _
    $region3: #{tpu_custom_call.1} parent=1 // pred_check_branch
      %11 = sbr.rel (0) target = $region5
    $region4: #{tpu_custom_call.1} parent=1 // pred_region
      _
    $region5: #{tpu_custom_call.1} parent=1 // pred_fallthru
      _
    // Predicated region
    $region6: #{tpu_custom_call.1} parent=1 // pred_check
      _
    $region7: #{tpu_custom_call.1} parent=1 // pred_check_branch
      %13 = sbr.rel (0) target = $region9
    $region8: #{tpu_custom_call.1} parent=1 // pred_region
      %15 = vsyncadd [#allocation4], 0
      %s17 = sshll.u32 %s1, 4
      %s18 = int_to_ptr.hbm [resolvable:$true] %s17
      %s19 = sshll.u32 [#allocation3], 4
      %s20 = int_to_ptr.vmem [resolvable:$true] %s19
      %22 = dma.hbm_to_vmem [thread:$0]  %s18, 128, %s20, [#allocation4]
    $region9: #{tpu_custom_call.1} parent=1 // pred_fallthru
      _
    // Predicated region
    $region10: #{tpu_custom_call.1} parent=1 // pred_check
      _
    $region11: #{tpu_custom_call.1} parent=1 // pred_check_branch
      %24 = sbr.rel (0) target = $region13
    $region12: #{tpu_custom_call.1} parent=1 // pred_region
      _
    $region13: #{tpu_custom_call.1} parent=1 // pred_fallthru
      _
    // Predicated region
    $region14: #{tpu_custom_call.1} parent=1 // pred_check
      _
    $region15: #{tpu_custom_call.1} parent=1 // pred_check_branch
      %26 = sbr.rel (0) target = $region17
    $region16: #{tpu_custom_call.1} parent=1 // pred_region
      %28 = dma.done [#allocation4], 128
    $region17: #{tpu_custom_call.1} parent=1 // pred_fallthru
      _
    %p29 = scmp.eq.s32.totalorder 0, 0
    // Predicated region
    $region18: #{tpu_custom_call.1} parent=1 // pred_check
      %p30 = pneg %p29
    $region19: #{tpu_custom_call.1} parent=1 // pred_check_branch
      %32 = sbr.rel (%p30) target = $region21
    $region20: #{tpu_custom_call.1} parent=1 // pred_region
      %vm33 = vcmask 0
      %34 = vst.msk [vmem:[#allocation2] sm:$0x1] %vm33, 0.0
    $region21: #{tpu_custom_call.1} parent=1 // pred_fallthru
      _
    %v35 = vld [vmem:[%s0] sm:$0xff]
    %v36 = vld [vmem:[#allocation3] sm:$0xff]
    %v37 = vld [vmem:[%s2] sm:$0xff]
    %v38 = vsub.f32 %v35, %v36
    %v39 = vadd.f32 %v38, 1e-06
    %v40 = vmul.f32 %v39, %v39
    %vm41 = vcmask 261120
    %v42 = vsel %vm41, %v40, 0.0
    %43 = vadd.xlane.f32.xlu0 %v42
    %v44 = vpop.xlane.xlu0 %43
    %v45 = vrsqrt.pop %v44
    %v46 = vmul.f32 %v45, %v44
    %v47 = vmul.f32 %v46, %v45
    %v48 = vmul.f32 0.5, %v47
    %v49 = vsub.f32 1.5, %v48
    %v50 = vmul.f32 %v45, %v49
    %v51 = vmul.f32 %v44, %v50
    %vm52 = vcmp.eq.f32.partialorder %v44, inf
    %v53 = vsel %vm52, %v44, %v51
    %vm54 = vcmp.eq.f32.partialorder %v44, 0.0
    %v55 = vand.u32 %v44, 2147483648
    %v56 = vsel %vm54, %v55, %v53
    %v57 = vmul.f32 %v37, %v44
    %v58 = vsub.f32 1.0, %v37
    %v59 = vsub.f32 5.0, %v56
    %v60 = vmax.f32 %v59, 0.0
    %v61 = vmul.f32 %v60, %v60
    %v62 = vmul.f32 %v58, %v61
    %s63 = smul.u32 0, 8
    %v64 = vlaneseq
    %v65 = vshrl.u32 %v64, 7
    %v66 = vstv %s63
    %v67 = vadd.s32 %v66, %v65
    %vm68 = vcmp.lt.s32.totalorder %v67, 8
    %v69 = vadd.f32 %v57, %v62
    %v70 = vsel %vm68, %v69, 0.0
    %v71 = vld [vmem:[#allocation2] sm:$0x1]
    %vm72 = vcmask 7168
    %v73 = vsel %vm72, %v70, 0.0
    %v74 = vrot.slane %v73, 4
    %v75 = vadd.f32 %v73, %v74
    %v76 = vrot.slane %v75, 2
    %v77 = vadd.f32 %v75, %v76
    %v78 = vrot.slane %v77, 1
    %v79 = vadd.f32 %v77, %v78
    %v80 = vadd.f32 %v71, %v79
    %vm81 = vcmask 0
    %82 = vst.msk [vmem:[#allocation2] sm:$0x1] %vm81, %v80
    // Predicated region
    $region22: #{tpu_custom_call.1} parent=1 // pred_check
      %p83 = pneg %p29
    $region23: #{tpu_custom_call.1} parent=1 // pred_check_branch
      %85 = sbr.rel (%p83) target = $region25
    $region24: #{tpu_custom_call.1} parent=1 // pred_region
      %v86 = vld [vmem:[#allocation2] sm:$0x1]
      %v87 = vmul.f32 %v86, 0.125
      %88 = vst.msk [vmem:[#allocation6] sm:$0x1] %vm81, %v87
    $region25: #{tpu_custom_call.1} parent=1 // pred_fallthru
      _
    // Predicated region
    $region26: #{tpu_custom_call.1} parent=1 // pred_check
      _
    $region27: #{tpu_custom_call.1} parent=1 // pred_check_branch
      %90 = sbr.rel (0) target = $region29
    $region28: #{tpu_custom_call.1} parent=1 // pred_region
      %92 = vsyncadd [#allocation5], 0
      %s94 = sshll.u32 [#allocation6], 4
      %s95 = int_to_ptr.vmem [resolvable:$true] %s94
      %s96 = sshll.u32 %s3, 4
      %s97 = int_to_ptr.hbm [resolvable:$true] %s96
      %99 = dma.vmem_to_hbm [thread:$0]  %s95, 16, %s97, [#allocation5]
    $region29: #{tpu_custom_call.1} parent=1 // pred_fallthru
      _
    // Predicated region
    $region30: #{tpu_custom_call.1} parent=1 // pred_check
      _
    $region31: #{tpu_custom_call.1} parent=1 // pred_check_branch
      %101 = sbr.rel (0) target = $region33
    $region32: #{tpu_custom_call.1} parent=1 // pred_region
      %103 = dma.done [#allocation5], 16
    $region33: #{tpu_custom_call.1} parent=1 // pred_fallthru
      _
    %104 = vsyncpa [#allocation4], 1
    %105 = vsyncpa [#allocation5], 1

</llo_original>
